<compile_context>
chip_gen: v7x
topology: tpu7x:2x2x1
jax: 0.10.0
libtpu: 0.0.40
codegen_flags: <defaults>
</compile_context>

<pallas_src>
import jax
import jax.numpy as jnp
from jax.experimental import pallas as pl
from jax.experimental.pallas import tpu as pltpu

DEGREE = 6          # matches `degree = 6` in the reference script
LANES = 128
SUBLANES = 8

WIDE_LANES = 1024   # lane-dense slab width for large inputs (8 * 128)
BLOCK_ROWS = 256    # (256, 1024) f32 block = 1 MiB per buffer


def pr_kernel(w_ref, b_ref, x_ref, o_ref):
    """y = w0 + w1*x + ... + w6*x**6 + b (Horner form) on one VMEM tile."""
    # Hoist all SMEM scalar reads above the vector arithmetic chain.
    w = [w_ref[k] for k in range(DEGREE + 1)]
    c0 = w[0] + b_ref[0]                      # fold bias into constant term

    x = x_ref[...]                            # (block_rows, width) f32
    acc = jnp.full_like(x, w[DEGREE])
    for k in range(DEGREE - 1, 0, -1):        # static unroll: 6 FMA-shaped steps
        acc = acc * x + w[k]
    o_ref[...] = acc * x + c0


def pr_forward(x, weight, bias):
    """Pallas equivalent of PR.forward.

    x      : any-shape f32 array (treated as flat, like x.reshape(-1, 1))
    weight : (1, DEGREE+1) f32   (nn.Linear(degree+1, 1).weight)
    bias   : (1,) f32            (nn.Linear(degree+1, 1).bias)
    returns: (N,) f32 where N = x.size
    """
    w = weight.reshape(-1).astype(jnp.float32)          # (DEGREE+1,)
    b = bias.reshape(-1).astype(jnp.float32)            # (1,)

    xf = x.reshape(-1).astype(jnp.float32)
    n = xf.shape[0]

    # Lane-dense slab for large inputs; narrow slab for tiny ones so the
    # padding overhead stays negligible either way.
    width = WIDE_LANES if n >= WIDE_LANES * SUBLANES else LANES
    rows = -(-n // width)
    # Block rows: as large as BLOCK_ROWS, always a multiple of the sublane count.
    block_rows = min(BLOCK_ROWS, ((rows + SUBLANES - 1) // SUBLANES) * SUBLANES)
    rows_pad = ((rows + block_rows - 1) // block_rows) * block_rows
    n_pad = rows_pad * width

    if n_pad != n:                      # pad only the ragged tail
        xf = jnp.pad(xf, (0, n_pad - n))
    x2d = xf.reshape(rows_pad, width)

    out2d = pl.pallas_call(
        pr_kernel,
        out_shape=jax.ShapeDtypeStruct((rows_pad, width), jnp.float32),
        grid=(rows_pad // block_rows,),
        in_specs=[
            pl.BlockSpec(memory_space=pltpu.MemorySpace.SMEM),     # weights (7,)
            pl.BlockSpec(memory_space=pltpu.MemorySpace.SMEM),     # bias (1,)
            pl.BlockSpec((block_rows, width), lambda i: (i, 0)),   # x tile
        ],
        out_specs=pl.BlockSpec((block_rows, width), lambda i: (i, 0)),
        compiler_params=pltpu.CompilerParams(
            dimension_semantics=("parallel",)),
    )(w, b, x2d)

    out = out2d.reshape(-1)
    if n_pad != n:                      # slice only when we actually padded
        out = out[:n]
    return out


def pr_reference(x, weight, bias):
    """Pure-JAX reference matching the PyTorch forward exactly."""
    xf = x.reshape(-1, 1).astype(jnp.float32)
    powers = jnp.arange(DEGREE + 1, dtype=jnp.float32)[None, :]
    x_poly = xf ** powers                                # (N, DEGREE+1)
    y = x_poly @ weight.T + bias                         # (N, 1)
    return y.reshape(-1)


if __name__ == "__main__":
    key = jax.random.PRNGKey(0)
    k_x, k_w, k_b, k_x2 = jax.random.split(key, 4)

    # Deterministic nn.Linear(DEGREE+1, 1)-shaped parameters
    # (PyTorch default init: U(-1/sqrt(fan_in), 1/sqrt(fan_in))).
    fan_in = DEGREE + 1
    bound = 1.0 / jnp.sqrt(jnp.float32(fan_in))
    weight = jax.random.uniform(k_w, (1, fan_in), dtype=jnp.float32,
                                minval=-bound, maxval=bound)
    bias = jax.random.uniform(k_b, (1,), dtype=jnp.float32,
                              minval=-bound, maxval=bound)

    # Primary small test: 200 sample points in [-1, 1] (narrow-slab path,
    # ragged-tail padding).
    N = 200
    x = jax.random.uniform(k_x, (N,), dtype=jnp.float32, minval=-1.0, maxval=1.0)
    y_kernel = pr_forward(x, weight, bias)
    jax.block_until_ready(y_kernel)
    y_ref = pr_reference(x, weight, bias)
    assert y_kernel.shape == (N,)
    assert jnp.allclose(y_kernel, y_ref, atol=1e-5, rtol=1e-5), "mismatch (small)"

    # Secondary test: exercises the wide (256, 1024)-block path, a 2-step
    # "parallel" grid, and the ragged-tail branch (still only ~1 MiB of f32).
    N2 = BLOCK_ROWS * WIDE_LANES + 100
    x2 = jax.random.uniform(k_x2, (N2,), dtype=jnp.float32, minval=-1.0, maxval=1.0)
    y2_kernel = pr_forward(x2, weight, bias)
    jax.block_until_ready(y2_kernel)
    y2_ref = pr_reference(x2, weight, bias)
    assert y2_kernel.shape == (N2,)
    assert jnp.allclose(y2_kernel, y2_ref, atol=1e-5, rtol=1e-5), "mismatch (large)"

    print("KERNEL_OK")
</pallas_src>

<mosaic_0001>
module attributes {stable_mosaic.version = 11 : i64} {
  func.func @pr_kernel(%arg0: i32, %arg1: memref<7xf32, #tpu.memory_space<smem>>, %arg2: memref<1xf32, #tpu.memory_space<smem>>, %arg3: memref<8x128xf32, #tpu.memory_space<vmem>>, %arg4: memref<8x128xf32, #tpu.memory_space<vmem>>) attributes {dimension_semantics = [#tpu.dimension_semantics<parallel>], iteration_bounds = array<i64: 1>, scalar_prefetch = 0 : i64, scratch_operands = 0 : i64, tpu.core_type = #tpu.core_type<tc>, window_params = [{transform_indices = @transform_0, window_bounds = array<i64: 7>}, {transform_indices = @transform_1, window_bounds = array<i64: 1>}, {transform_indices = @transform_2, window_bounds = array<i64: 8, 128>}, {transform_indices = @transform_3, window_bounds = array<i64: 8, 128>}]} {
    %c0 = arith.constant 0 : index
    %0 = memref.load %arg1[%c0] : memref<7xf32, #tpu.memory_space<smem>>
    %c1 = arith.constant 1 : index
    %1 = memref.load %arg1[%c1] : memref<7xf32, #tpu.memory_space<smem>>
    %c2 = arith.constant 2 : index
    %2 = memref.load %arg1[%c2] : memref<7xf32, #tpu.memory_space<smem>>
    %c3 = arith.constant 3 : index
    %3 = memref.load %arg1[%c3] : memref<7xf32, #tpu.memory_space<smem>>
    %c4 = arith.constant 4 : index
    %4 = memref.load %arg1[%c4] : memref<7xf32, #tpu.memory_space<smem>>
    %c5 = arith.constant 5 : index
    %5 = memref.load %arg1[%c5] : memref<7xf32, #tpu.memory_space<smem>>
    %c6 = arith.constant 6 : index
    %6 = memref.load %arg1[%c6] : memref<7xf32, #tpu.memory_space<smem>>
    %c0_0 = arith.constant 0 : index
    %7 = memref.load %arg2[%c0_0] : memref<1xf32, #tpu.memory_space<smem>>
    %8 = arith.addf %0, %7 : f32
    %c0_1 = arith.constant 0 : index
    %c0_2 = arith.constant 0 : index
    %9 = vector.load %arg3[%c0_1, %c0_2] : memref<8x128xf32, #tpu.memory_space<vmem>>, vector<8x128xf32>
    %10 = vector.broadcast %6 : f32 to vector<8x128xf32>
    %11 = arith.mulf %10, %9 : vector<8x128xf32>
    %12 = vector.broadcast %5 : f32 to vector<8x128xf32>
    %13 = arith.addf %11, %12 : vector<8x128xf32>
    %14 = arith.mulf %13, %9 : vector<8x128xf32>
    %15 = vector.broadcast %4 : f32 to vector<8x128xf32>
    %16 = arith.addf %14, %15 : vector<8x128xf32>
    %17 = arith.mulf %16, %9 : vector<8x128xf32>
    %18 = vector.broadcast %3 : f32 to vector<8x128xf32>
    %19 = arith.addf %17, %18 : vector<8x128xf32>
    %20 = arith.mulf %19, %9 : vector<8x128xf32>
    %21 = vector.broadcast %2 : f32 to vector<8x128xf32>
    %22 = arith.addf %20, %21 : vector<8x128xf32>
    %23 = arith.mulf %22, %9 : vector<8x128xf32>
    %24 = vector.broadcast %1 : f32 to vector<8x128xf32>
    %25 = arith.addf %23, %24 : vector<8x128xf32>
    %26 = arith.mulf %25, %9 : vector<8x128xf32>
    %27 = vector.broadcast %8 : f32 to vector<8x128xf32>
    %28 = arith.addf %26, %27 : vector<8x128xf32>
    %c0_3 = arith.constant 0 : index
    %c0_4 = arith.constant 0 : index
    %29 = vector.load %arg4[%c0_3, %c0_4] : memref<8x128xf32, #tpu.memory_space<vmem>>, vector<8x128xf32>
    tpu.vector_store %arg4[%c0_3, %c0_4], %28 {strides = array<i32>} : memref<8x128xf32, #tpu.memory_space<vmem>>, vector<8x128xf32>,
    return
  }
  func.func @transform_0(%arg0: i32) -> i32 {
    %c0_i32 = arith.constant 0 : i32
    %c0_i32_0 = arith.constant 0 : i32
    return %c0_i32 : i32
  }
  func.func @transform_1(%arg0: i32) -> i32 {
    %c0_i32 = arith.constant 0 : i32
    %c0_i32_0 = arith.constant 0 : i32
    return %c0_i32 : i32
  }
  func.func @transform_2(%arg0: i32) -> (i32, i32) {
    %c0_i32 = arith.constant 0 : i32
    %c0_i32_0 = arith.constant 0 : i32
    return %arg0, %c0_i32 : i32, i32
  }
  func.func @transform_3(%arg0: i32) -> (i32, i32) {
    %c0_i32 = arith.constant 0 : i32
    %c0_i32_0 = arith.constant 0 : i32
    return %arg0, %c0_i32 : i32, i32
  }
}

</mosaic_0001>

<llo_original>
// kernel: tpu_custom_call.1
$region0: #{tpu_custom_call.1}
  #allocation0 [shape = 'u32[]', space=smem, size = 0x4, offset = 0x4, fixed_abs, tag = 'smem constant byte address 0x4 - core index']
  #allocation1 [shape = 'u32[144,128]{1,0:T(1,128)}', space=vmem, size = 0x12000, scoped, tag = 'internal scratch']
  #allocation2 [shape = 'f32[1]{0:T(128)S(6)}', space=smem, size = 0x200, scoped, tag = 'scoped memory for tpu_custom_call.1']
  %s0 = inlined_call_operand.vmem [shape: f32[7], index: 0, kind: input, shape index: {}]
  %s1 = inlined_call_operand.<no memory space> [shape: f32[1], index: 1, kind: input, shape index: {}]
  %s2 = inlined_call_operand.hbm [shape: f32[8,128], index: 2, kind: input, shape index: {}]
  %s3 = inlined_call_operand.hbm [shape: f32[8,128], index: 3, kind: output, shape index: {}]
  %s4 = sld [smem:[#allocation0]]
  $region30: #{tpu_custom_call.1} parent=0
    _
  %s6 = ssub.s32 1, %s4
  %s7 = scalar_select 0, %s6, %s4
  %8 = sst [smem:[#allocation2]] %s1
  $region1: #{tpu_custom_call.1} parent=0
    #allocation3 [shape = 'u8[512]{0}', space=smem, size = 0x200, scoped, tag = 'input window, operand 0, single buffered']
    #allocation4 [shape = 's32[1]{0}', space=sflag, size = 0x4, scoped, tag = 'scoped memory for tpu_custom_call.1']
    #allocation5 [shape = 's32[1]{0}', space=sflag, size = 0x4, scoped, tag = 'scoped memory for tpu_custom_call.1']
    #allocation6 [shape = 's32[1]{0}', space=sflag, size = 0x4, scoped, tag = 'scoped memory for tpu_custom_call.1']
    #allocation7 [shape = 'u8[4096]{0}', space=vmem, size = 0x1000, scoped, tag = 'input window, operand 2, single buffered']
    #allocation8 [shape = 'u8[4096]{0}', space=vmem, size = 0x1000, scoped, tag = 'output window, operand 0, single buffered']
    %9 = vsyncpa [#allocation6], 0
    %10 = vsyncpa [#allocation4], 0
    %11 = vsyncpa [#allocation5], 0
    // Predicated region
    $region2: #{tpu_custom_call.1} parent=1 // pred_check
      _
    $region3: #{tpu_custom_call.1} parent=1 // pred_check_branch
      %13 = sbr.rel (0) target = $region5
    $region4: #{tpu_custom_call.1} parent=1 // pred_region
      %s15 = ssub.s32 16, 16
      %16 = vsyncadd [#allocation6], %s15
      %s18 = sshll.u32 %s0, 4
      %s19 = int_to_ptr.vmem [resolvable:$true] %s18
      %21 = dma.vmem_to_smem %s19, 16, [#allocation3], [#allocation6]
    $region5: #{tpu_custom_call.1} parent=1 // pred_fallthru
      _
    // Predicated region
    $region6: #{tpu_custom_call.1} parent=1 // pred_check
      _
    $region7: #{tpu_custom_call.1} parent=1 // pred_check_branch
      %23 = sbr.rel (0) target = $region9
    $region8: #{tpu_custom_call.1} parent=1 // pred_region
      _
    $region9: #{tpu_custom_call.1} parent=1 // pred_fallthru
      _
    // Predicated region
    $region10: #{tpu_custom_call.1} parent=1 // pred_check
      _
    $region11: #{tpu_custom_call.1} parent=1 // pred_check_branch
      %25 = sbr.rel (0) target = $region13
    $region12: #{tpu_custom_call.1} parent=1 // pred_region
      %s27 = ssub.s32 128, 128
      %28 = vsyncadd [#allocation4], %s27
      %s30 = sshll.u32 [#allocation7], 4
      %s31 = int_to_ptr.vmem [resolvable:$true] %s30
      %33 = dma.hbm_to_vmem [thread:$0]  %s2, 128, %s31, [#allocation4]
    $region13: #{tpu_custom_call.1} parent=1 // pred_fallthru
      _
    // Predicated region
    $region14: #{tpu_custom_call.1} parent=1 // pred_check
      _
    $region15: #{tpu_custom_call.1} parent=1 // pred_check_branch
      %35 = sbr.rel (0) target = $region17
    $region16: #{tpu_custom_call.1} parent=1 // pred_region
      %36 = dma.done [#allocation6], 16
    $region17: #{tpu_custom_call.1} parent=1 // pred_fallthru
      _
    // Predicated region
    $region18: #{tpu_custom_call.1} parent=1 // pred_check
      _
    $region19: #{tpu_custom_call.1} parent=1 // pred_check_branch
      %38 = sbr.rel (0) target = $region21
    $region20: #{tpu_custom_call.1} parent=1 // pred_region
      %39 = dma.done [#allocation4], 128
    $region21: #{tpu_custom_call.1} parent=1 // pred_fallthru
      _
    %40 = sfence
    %s41 = sld [smem:[#allocation3]]
    %s42 = sld [smem:[#allocation3 + $0x1]]
    %s43 = sld [smem:[#allocation3 + $0x2]]
    %s44 = sld [smem:[#allocation3 + $0x3]]
    %s45 = sld [smem:[#allocation3 + $0x4]]
    %s46 = sld [smem:[#allocation3 + $0x5]]
    %s47 = sld [smem:[#allocation3 + $0x6]]
    %s48 = sld [smem:[#allocation2]]
    %s49 = sadd.f32 %s41, %s48
    %v50 = vld [vmem:[#allocation7] sm:$0xff]
    %v51 = vstv %s47
    %v52 = vmul.f32 %v51, %v50
    %v53 = vstv %s46
    %v54 = vadd.f32 %v52, %v53
    %v55 = vmul.f32 %v54, %v50
    %v56 = vstv %s45
    %v57 = vadd.f32 %v55, %v56
    %v58 = vmul.f32 %v57, %v50
    %v59 = vstv %s44
    %v60 = vadd.f32 %v58, %v59
    %v61 = vmul.f32 %v60, %v50
    %v62 = vstv %s43
    %v63 = vadd.f32 %v61, %v62
    %v64 = vmul.f32 %v63, %v50
    %v65 = vstv %s42
    %v66 = vadd.f32 %v64, %v65
    %v67 = vmul.f32 %v66, %v50
    %v68 = vstv %s49
    %v69 = vadd.f32 %v67, %v68
    %70 = vst [vmem:[#allocation8] sm:$0xff] %v69
    // Predicated region
    $region22: #{tpu_custom_call.1} parent=1 // pred_check
      _
    $region23: #{tpu_custom_call.1} parent=1 // pred_check_branch
      %72 = sbr.rel (0) target = $region25
    $region24: #{tpu_custom_call.1} parent=1 // pred_region
      %s74 = ssub.s32 128, 128
      %75 = vsyncadd [#allocation5], %s74
      %s77 = sshll.u32 [#allocation8], 4
      %s78 = int_to_ptr.vmem [resolvable:$true] %s77
      %80 = dma.vmem_to_hbm [thread:$0]  %s78, 128, %s3, [#allocation5]
    $region25: #{tpu_custom_call.1} parent=1 // pred_fallthru
      _
    // Predicated region
    $region26: #{tpu_custom_call.1} parent=1 // pred_check
      _
    $region27: #{tpu_custom_call.1} parent=1 // pred_check_branch
      %82 = sbr.rel (0) target = $region29
    $region28: #{tpu_custom_call.1} parent=1 // pred_region
      %83 = dma.done [#allocation5], 128
    $region29: #{tpu_custom_call.1} parent=1 // pred_fallthru
      _
    %84 = vsyncpa [#allocation4], 1
    %85 = vsyncpa [#allocation5], 1
    %86 = vsyncpa [#allocation6], 1

</llo_original>
